<compile_context>
chip_gen: v7x
topology: tpu7x:2x2x1
jax: 0.10.0
libtpu: 0.0.40
codegen_flags: <defaults>
</compile_context>

<pallas_src>
import jax
import jax.numpy as jnp
from jax.experimental import pallas as pl
from jax.experimental.pallas import tpu as pltpu

# ----- small, module-consistent hyperparameters -----
NUM_CATEGORIES = 32   # num_categories (index 0 is the padding row)
EMB_DIM = 32          # category_embedding_dim
OUT_DIM = 128         # category_output_dim (multiple of 128 -> lane-dense stores)
BATCH = 512           # category ids encoded per call
BLOCK_B = 256         # rows per grid step: 2 steps -> both v7x TCs used,
                      # one-hot capped at 32 vregs, minimal step overhead


def naml_category_encoder_kernel(cat_ref, lut_ref, o_ref):
    # cat_ref : (BLOCK_B, 1) int32  -- category ids for this block of rows
    # lut_ref : (C, O) f32          -- fused LUT = relu(E @ W^T + b), resident in VMEM
    # o_ref   : (BLOCK_B, O) f32    -- lane-dense output tile
    cat = cat_ref[...]                                        # (TB, 1)
    tb = cat.shape[0]
    c = lut_ref.shape[0]

    # Embedding + Linear + bias + ReLU collapse to one one-hot matmul on the MXU.
    col = jax.lax.broadcasted_iota(jnp.int32, (tb, c), 1)     # (TB, C)
    one_hot = (col == cat).astype(jnp.float32)                # (TB, C)
    o_ref[...] = jnp.dot(one_hot, lut_ref[...],
                         preferred_element_type=jnp.float32).astype(o_ref.dtype)


def naml_category_encoder(category, emb_table, w_t, b, *, block_b=BLOCK_B):
    """category: (B,) int32. Returns (B, OUT_DIM) float32."""
    B = category.shape[0]
    assert B % block_b == 0
    cat2d = category.reshape(B, 1).astype(jnp.int32)   # layout plumbing in wrapper

    # Algebraic fusion (see header): one tiny XLA op / constant-folded for static
    # weights.  Row 0 of emb_table is zero, so lut[0] = relu(b) (padding semantics).
    lut = jax.nn.relu(emb_table @ w_t + b)             # (C, O) = (32, 128)
    C, O = lut.shape

    # TODO(synk): if the surrounding NAML model encodes several categorical
    # features (category, subcategory, ...), stack their ids/LUTs and encode all
    # of them in this single pallas_call instead of one launch per feature.
    return pl.pallas_call(
        naml_category_encoder_kernel,
        out_shape=jax.ShapeDtypeStruct((B, O), jnp.float32),
        grid_spec=pltpu.PrefetchScalarGridSpec(
            num_scalar_prefetch=0,
            grid=(B // block_b,),
            in_specs=[
                pl.BlockSpec((block_b, 1), lambda i: (i, 0)),        # ids: per-block
                pl.BlockSpec((C, O), lambda i: (0, 0),               # LUT: resident,
                             pipeline_mode=pl.Buffered(1)),          #      single-buffered
            ],
            out_specs=pl.BlockSpec((block_b, O), lambda i: (i, 0)),
        ),
        compiler_params=pltpu.CompilerParams(
            dimension_semantics=("parallel",)),
    )(cat2d, lut)


def reference(category, emb_table, w_t, b):
    """Pure-JAX reference of the same forward pass."""
    emb = emb_table[category]                       # (B, D) gather
    return jax.nn.relu(emb @ w_t + b)               # (B, O)


if __name__ == "__main__":
    key = jax.random.PRNGKey(0)
    k_cat, k_emb, k_w, k_b = jax.random.split(key, 4)

    # Parameters (Linear weight stored pre-transposed: (in, out)).
    emb_table = jax.random.normal(k_emb, (NUM_CATEGORIES, EMB_DIM), jnp.float32) * 0.1
    emb_table = emb_table.at[0].set(0.0)            # padding_idx=0 -> zero row
    w_t = jax.random.normal(k_w, (EMB_DIM, OUT_DIM), jnp.float32) * 0.1
    b = jax.random.normal(k_b, (1, OUT_DIM), jnp.float32) * 0.1

    # Inputs: category ids, including some padding ids (0).
    category = jax.random.randint(k_cat, (BATCH,), 0, NUM_CATEGORIES)

    out = naml_category_encoder(category, emb_table, w_t, b)
    out = jax.block_until_ready(out)

    ref = reference(category, emb_table, w_t, b)
    assert out.shape == (BATCH, OUT_DIM)
    assert bool(jnp.all(jnp.isfinite(out)))
    assert bool(jnp.allclose(out, ref, atol=1e-4, rtol=1e-4)), \
        f"max abs err {float(jnp.max(jnp.abs(out - ref)))}"

    print("KERNEL_OK")
</pallas_src>

<mosaic_0001>
module attributes {stable_mosaic.version = 11 : i64} {
  func.func @naml_category_encoder_kernel(%arg0: i32, %arg1: memref<256x1xi32, #tpu.memory_space<vmem>>, %arg2: memref<32x128xf32, #tpu.memory_space<vmem>>, %arg3: memref<256x128xf32, #tpu.memory_space<vmem>>) attributes {dimension_semantics = [#tpu.dimension_semantics<parallel>], iteration_bounds = array<i64: 2>, scalar_prefetch = 0 : i64, scratch_operands = 0 : i64, tpu.core_type = #tpu.core_type<tc>, window_params = [{transform_indices = @transform_0, window_bounds = array<i64: 256, 1>}, {pipeline_mode = #tpu.pipeline_mode<synchronous>, transform_indices = @transform_1, window_bounds = array<i64: 32, 128>}, {transform_indices = @transform_2, window_bounds = array<i64: 256, 128>}]} {
    %c0 = arith.constant 0 : index
    %c0_0 = arith.constant 0 : index
    %0 = vector.load %arg1[%c0, %c0_0] : memref<256x1xi32, #tpu.memory_space<vmem>>, vector<256x1xi32>
    %1 = tpu.iota {dimensions = array<i32: 1>} : vector<256x32xi32>
    %2 = vector.broadcast %0 : vector<256x1xi32> to vector<256x32xi32>
    %3 = arith.cmpi eq, %1, %2 : vector<256x32xi32>
    %4 = arith.extui %3 : vector<256x32xi1> to vector<256x32xi32>
    %5 = arith.sitofp %4 : vector<256x32xi32> to vector<256x32xf32>
    %c0_1 = arith.constant 0 : index
    %c0_2 = arith.constant 0 : index
    %6 = vector.load %arg2[%c0_1, %c0_2] : memref<32x128xf32, #tpu.memory_space<vmem>>, vector<32x128xf32>
    %cst = arith.constant dense<0.000000e+00> : vector<256x128xf32>
    %7 = tpu.matmul %5, %6, %cst {dimension_numbers = #tpu.dot_dimension_numbers<[1], [0], [0], [1], [0, 0, 1, 1], [], []>} : vector<256x32xf32>, vector<32x128xf32>, vector<256x128xf32> -> vector<256x128xf32>
    %c0_3 = arith.constant 0 : index
    %c0_4 = arith.constant 0 : index
    %8 = vector.load %arg3[%c0_3, %c0_4] : memref<256x128xf32, #tpu.memory_space<vmem>>, vector<256x128xf32>
    tpu.vector_store %arg3[%c0_3, %c0_4], %7 {strides = array<i32>} : memref<256x128xf32, #tpu.memory_space<vmem>>, vector<256x128xf32>,
    return
  }
  func.func @transform_0(%arg0: i32) -> (i32, i32) {
    %c0_i32 = arith.constant 0 : i32
    %c0_i32_0 = arith.constant 0 : i32
    return %arg0, %c0_i32 : i32, i32
  }
  func.func @transform_1(%arg0: i32) -> (i32, i32) {
    %c0_i32 = arith.constant 0 : i32
    %c0_i32_0 = arith.constant 0 : i32
    %c0_i32_1 = arith.constant 0 : i32
    return %c0_i32, %c0_i32_0 : i32, i32
  }
  func.func @transform_2(%arg0: i32) -> (i32, i32) {
    %c0_i32 = arith.constant 0 : i32
    %c0_i32_0 = arith.constant 0 : i32
    return %arg0, %c0_i32 : i32, i32
  }
}

</mosaic_0001>

<llo_original>
// kernel: tpu_custom_call.1
$region0: #{tpu_custom_call.1}
  #allocation0 [shape = 'u32[]', space=smem, size = 0x4, offset = 0x4, fixed_abs, tag = 'smem constant byte address 0x4 - core index']
  #allocation1 [shape = 'u32[144,128]{1,0:T(1,128)}', space=vmem, size = 0x12000, scoped, tag = 'internal scratch']
  %s0 = inlined_call_operand.vmem [shape: s32[512,1], index: 0, kind: input, shape index: {}]
  %s1 = inlined_call_operand.vmem [shape: f32[32,128], index: 1, kind: input, shape index: {}]
  %s2 = inlined_call_operand.hbm [shape: f32[512,128], index: 2, kind: output, shape index: {}]
  %s3 = sld [smem:[#allocation0]]
  $region41: #{tpu_custom_call.1} parent=0
    _
  %s5 = ssub.s32 1, %s3
  %s6 = scalar_select 0, %s5, %s3
  $region1: #{tpu_custom_call.1} parent=0
    #allocation2 [shape = 'u8[262144]{0}', space=vmem, size = 0x40000, scoped, tag = 'output window, operand 0']
    #allocation3 [shape = 's32[2]{0}', space=sflag, size = 0x8, scoped, tag = 'scoped memory for tpu_custom_call.1']
    %7 = vsyncpa [#allocation3], 0
    %s8 = scalar_lea.sflag [#allocation3], 1
    %9 = vsyncpa %s8, 0
    loop: start=0, step=1, limit=4
    $region2: #{tpu_custom_call.1} parent=1 // loop_pre_header
      _
    $region3: #{tpu_custom_call.1} parent=1 // loop_header
      %s11 = sphi 0, %s15
      %p12 = scmp.ge.s32.totalorder %s11, 4
      %s21 = sphi 0, %s23
      %s24 = sphi 0, %s21
      %s25 = sphi 0, %s24
      %s41 = sphi 0, %s25
      %s45 = sphi 0, %s45
      %s47 = sphi 0, %s45
      %s48 = sphi 0, %s47
      %s62 = sphi 0, %s48
      %s68 = sphi 0, %s70
      %s71 = sphi 0, %s68
      %s72 = sphi 0, %s71
      %s88 = sphi 0, %s72
    $region4: #{tpu_custom_call.1} parent=1 // loop_header_branch
      %14 = sbr.rel (%p12) target = $region8
    $region5: #{tpu_custom_call.1} parent=1 // loop_body
      %s16 = ssub.s32 %s11, 1
      %s17 = ssub.s32 %s11, 2
      %s18 = sadd.s32 %s11, 1
      %s19 = ssub.s32 %s11, %s18
      %p20 = scmp.eq.s32.totalorder %s19, 0
      %s22 = sadd.s32 %s21, 1
      %s23 = scalar_select %p20, %s21, %s22
      %p26 = pneg %p20
      %p27 = scmp.eq.s32.totalorder %s11, 1
      %p28 = por %p26, %p27
      %p29 = scmp.ne.s32.totalorder %s21, %s24
      %p30 = scmp.eq.s32.totalorder %s11, 0
      %p31 = por %p29, %p30
      %p32 = scmp.ne.s32.totalorder %s21, %s24
      %p33 = scmp.eq.s32.totalorder %s16, 1
      %p34 = por %p32, %p33
      %p35 = scmp.ne.s32.totalorder %s24, %s25
      %p36 = scmp.eq.s32.totalorder %s16, 0
      %p37 = por %p35, %p36
      %p38 = scmp.ne.s32.totalorder %s24, %s25
      %p39 = scmp.eq.s32.totalorder %s17, 1
      %p40 = por %p38, %p39
      %p42 = scmp.ne.s32.totalorder %s25, %s41
      %p43 = scmp.eq.s32.totalorder %s17, 0
      %p44 = por %p42, %p43
      %s46 = sadd.s32 %s45, 1
      %p49 = scmp.eq.s32.totalorder %s11, 1
      %p50 = scmp.ne.s32.totalorder %s45, %s47
      %p51 = scmp.eq.s32.totalorder %s11, 0
      %p52 = por %p50, %p51
      %p53 = scmp.ne.s32.totalorder %s45, %s47
      %p54 = scmp.eq.s32.totalorder %s16, 1
      %p55 = por %p53, %p54
      %p56 = scmp.ne.s32.totalorder %s47, %s48
      %p57 = scmp.eq.s32.totalorder %s16, 0
      %p58 = por %p56, %p57
      %p59 = scmp.ne.s32.totalorder %s47, %s48
      %p60 = scmp.eq.s32.totalorder %s17, 1
      %p61 = por %p59, %p60
      %p63 = scmp.ne.s32.totalorder %s48, %s62
      %p64 = scmp.eq.s32.totalorder %s17, 0
      %p65 = por %p63, %p64
      %s66 = ssub.s32 %s11, %s18
      %p67 = scmp.eq.s32.totalorder %s66, 0
      %s69 = sadd.s32 %s68, 1
      %s70 = scalar_select %p67, %s68, %s69
      %p73 = pneg %p67
      %p74 = scmp.eq.s32.totalorder %s11, 1
      %p75 = por %p73, %p74
      %p76 = scmp.ne.s32.totalorder %s68, %s71
      %p77 = scmp.eq.s32.totalorder %s11, 0
      %p78 = por %p76, %p77
      %p79 = scmp.ne.s32.totalorder %s68, %s71
      %p80 = scmp.eq.s32.totalorder %s16, 1
      %p81 = por %p79, %p80
      %p82 = scmp.ne.s32.totalorder %s71, %s72
      %p83 = scmp.eq.s32.totalorder %s16, 0
      %p84 = por %p82, %p83
      %p85 = scmp.ne.s32.totalorder %s71, %s72
      %p86 = scmp.eq.s32.totalorder %s17, 1
      %p87 = por %p85, %p86
      %p89 = scmp.ne.s32.totalorder %s72, %s88
      %p90 = scmp.eq.s32.totalorder %s17, 0
      %p91 = por %p89, %p90
      %p92 = scmp.le.s32.totalorder 1, %s11
      %p93 = scmp.lt.s32.totalorder %s11, 3
      %p94 = pnand %p92, %p93
      %p95 = pneg %p94
      // Predicated region
      $region9: #{tpu_custom_call.1} parent=5 // pred_check
        _
      $region10: #{tpu_custom_call.1} parent=5 // pred_check_branch
        %97 = sbr.rel (%p94) target = $region12
      $region11: #{tpu_custom_call.1} parent=5 // pred_region
        %s98 = ssub.s32 %s11, 1
        // Predicated region
        $region13: #{tpu_custom_call.1} parent=11 // pred_check
          %p99 = pneg %p58
        $region14: #{tpu_custom_call.1} parent=11 // pred_check_branch
          %101 = sbr.rel (%p99) target = $region16
        $region15: #{tpu_custom_call.1} parent=11 // pred_region
          _
        $region16: #{tpu_custom_call.1} parent=11 // pred_fallthru
          _
      $region12: #{tpu_custom_call.1} parent=5 // pred_fallthru
        _
      %p102 = scmp.lt.s32.totalorder %s11, 2
      // Predicated region
      $region17: #{tpu_custom_call.1} parent=5 // pred_check
        %p103 = pneg %p102
      $region18: #{tpu_custom_call.1} parent=5 // pred_check_branch
        %105 = sbr.rel (%p103) target = $region20
      $region19: #{tpu_custom_call.1} parent=5 // pred_region
        // Predicated region
        $region21: #{tpu_custom_call.1} parent=19 // pred_check
          %p106 = pneg %p31
        $region22: #{tpu_custom_call.1} parent=19 // pred_check_branch
          %108 = sbr.rel (%p106) target = $region24
        $region23: #{tpu_custom_call.1} parent=19 // pred_region
          %s109 = smul.u32 32, %s11
          %p110 = scmp.lt.s32.totalorder %s109, 63
          %s111 = scalar_select %p110, %s109, 63
          %s112 = smul.addr %s111, 8
          %s113 = scalar_lea.vmem %s0, %s112
          %s114 = smul.u32 32, %s11
        $region24: #{tpu_custom_call.1} parent=19 // pred_fallthru
          _
      $region20: #{tpu_custom_call.1} parent=5 // pred_fallthru
        _
      %p115 = scmp.le.s32.totalorder 1, %s11
      %p116 = scmp.lt.s32.totalorder %s11, 3
      %p117 = pnand %p115, %p116
      %p118 = pneg %p117
      // Predicated region
      $region25: #{tpu_custom_call.1} parent=5 // pred_check
        _
      $region26: #{tpu_custom_call.1} parent=5 // pred_check_branch
        %120 = sbr.rel (%p117) target = $region28
      $region27: #{tpu_custom_call.1} parent=5 // pred_region
        %s121 = ssub.s32 %s11, 1
        %s122 = smul.u32 32, %s16
        %p123 = scmp.lt.s32.totalorder %s122, 63
        %s124 = scalar_select %p123, %s122, 63
        %s125 = smul.addr %s124, 8
        %s126 = scalar_lea.vmem %s0, %s125
        %p127 = pneg %p37
        %p128 = pneg %p34
        %p129 = pneg %p58
        %p130 = pneg %p55
        %p131 = pneg %p84
        %p132 = pneg %p81
        %s133 = sand.u32 %s71, 1
        %s134 = scalar_lea.sflag [#allocation3], %s133
        %s135 = sand.u32 %s71, 1
        %s136 = smul.addr %s135, 256
        %s137 = scalar_lea.vmem [#allocation2], %s136
        %s138 = smul.u32 32, %s16
        %p139 = scmp.lt.s32.totalorder %s138, 63
        %s140 = scalar_select %p139, %s138, 63
        %s141 = smul.addr %s140, 8
        %s142 = scalar_lea.vmem %s0, %s141
        %s143 = smul.u32 32, %s16
        %s144 = smul.u32 32, %s16
        %v145 = vld [vmem:[%s142] sm:$0xff]
        %v146 = vld [vmem:[%s142 + $0x8] sm:$0xff]
        %v147 = vld [vmem:[%s142 + $0x10] sm:$0xff]
        %v148 = vld [vmem:[%s142 + $0x18] sm:$0xff]
        %v149 = vld [vmem:[%s142 + $0x20] sm:$0xff]
        %v150 = vld [vmem:[%s142 + $0x28] sm:$0xff]
        %v151 = vld [vmem:[%s142 + $0x30] sm:$0xff]
        %v152 = vld [vmem:[%s142 + $0x38] sm:$0xff]
        %v153 = vld [vmem:[%s142 + $0x40] sm:$0xff]
        %v154 = vld [vmem:[%s142 + $0x48] sm:$0xff]
        %v155 = vld [vmem:[%s142 + $0x50] sm:$0xff]
        %v156 = vld [vmem:[%s142 + $0x58] sm:$0xff]
        %v157 = vld [vmem:[%s142 + $0x60] sm:$0xff]
        %v158 = vld [vmem:[%s142 + $0x68] sm:$0xff]
        %v159 = vld [vmem:[%s142 + $0x70] sm:$0xff]
        %v160 = vld [vmem:[%s142 + $0x78] sm:$0xff]
        %v161 = vld [vmem:[%s142 + $0x80] sm:$0xff]
        %v162 = vld [vmem:[%s142 + $0x88] sm:$0xff]
        %v163 = vld [vmem:[%s142 + $0x90] sm:$0xff]
        %v164 = vld [vmem:[%s142 + $0x98] sm:$0xff]
        %v165 = vld [vmem:[%s142 + $0xa0] sm:$0xff]
        %v166 = vld [vmem:[%s142 + $0xa8] sm:$0xff]
        %v167 = vld [vmem:[%s142 + $0xb0] sm:$0xff]
        %v168 = vld [vmem:[%s142 + $0xb8] sm:$0xff]
        %v169 = vld [vmem:[%s142 + $0xc0] sm:$0xff]
        %v170 = vld [vmem:[%s142 + $0xc8] sm:$0xff]
        %v171 = vld [vmem:[%s142 + $0xd0] sm:$0xff]
        %v172 = vld [vmem:[%s142 + $0xd8] sm:$0xff]
        %v173 = vld [vmem:[%s142 + $0xe0] sm:$0xff]
        %v174 = vld [vmem:[%s142 + $0xe8] sm:$0xff]
        %v175 = vld [vmem:[%s142 + $0xf0] sm:$0xff]
        %v176 = vld [vmem:[%s142 + $0xf8] sm:$0xff]
        %v177 = vlaneseq
        %v178 = vand.u32 %v177, 127
        %179 = vset.pattern.permute.xlu0 0
        %180 = vperm.xlu0 %179, %v145
        %v181 = vpop.permute.xlu0 %180
        %182 = vset.pattern.permute.xlu0 0
        %183 = vperm.xlu0 %182, %v146
        %v184 = vpop.permute.xlu0 %183
        %185 = vset.pattern.permute.xlu0 0
        %186 = vperm.xlu0 %185, %v147
        %v187 = vpop.permute.xlu0 %186
        %188 = vset.pattern.permute.xlu0 0
        %189 = vperm.xlu0 %188, %v148
        %v190 = vpop.permute.xlu0 %189
        %191 = vset.pattern.permute.xlu0 0
        %192 = vperm.xlu0 %191, %v149
        %v193 = vpop.permute.xlu0 %192
        %194 = vset.pattern.permute.xlu0 0
        %195 = vperm.xlu0 %194, %v150
        %v196 = vpop.permute.xlu0 %195
        %197 = vset.pattern.permute.xlu0 0
        %198 = vperm.xlu0 %197, %v151
        %v199 = vpop.permute.xlu0 %198
        %200 = vset.pattern.permute.xlu0 0
        %201 = vperm.xlu0 %200, %v152
        %v202 = vpop.permute.xlu0 %201
        %203 = vset.pattern.permute.xlu0 0
        %204 = vperm.xlu0 %203, %v153
        %v205 = vpop.permute.xlu0 %204
        %206 = vset.pattern.permute.xlu0 0
        %207 = vperm.xlu0 %206, %v154
        %v208 = vpop.permute.xlu0 %207
        %209 = vset.pattern.permute.xlu0 0
        %210 = vperm.xlu0 %209, %v155
        %v211 = vpop.permute.xlu0 %210
        %212 = vset.pattern.permute.xlu0 0
        %213 = vperm.xlu0 %212, %v156
        %v214 = vpop.permute.xlu0 %213
        %215 = vset.pattern.permute.xlu0 0
        %216 = vperm.xlu0 %215, %v157
        %v217 = vpop.permute.xlu0 %216
        %218 = vset.pattern.permute.xlu0 0
        %219 = vperm.xlu0 %218, %v158
        %v220 = vpop.permute.xlu0 %219
        %221 = vset.pattern.permute.xlu0 0
        %222 = vperm.xlu0 %221, %v159
        %v223 = vpop.permute.xlu0 %222
        %224 = vset.pattern.permute.xlu0 0
        %225 = vperm.xlu0 %224, %v160
        %v226 = vpop.permute.xlu0 %225
        %227 = vset.pattern.permute.xlu0 0
        %228 = vperm.xlu0 %227, %v161
        %v229 = vpop.permute.xlu0 %228
        %230 = vset.pattern.permute.xlu0 0
        %231 = vperm.xlu0 %230, %v162
        %v232 = vpop.permute.xlu0 %231
        %233 = vset.pattern.permute.xlu0 0
        %234 = vperm.xlu0 %233, %v163
        %v235 = vpop.permute.xlu0 %234
        %236 = vset.pattern.permute.xlu0 0
        %237 = vperm.xlu0 %236, %v164
        %v238 = vpop.permute.xlu0 %237
        %239 = vset.pattern.permute.xlu0 0
        %240 = vperm.xlu0 %239, %v165
        %v241 = vpop.permute.xlu0 %240
        %242 = vset.pattern.permute.xlu0 0
        %243 = vperm.xlu0 %242, %v166
        %v244 = vpop.permute.xlu0 %243
        %245 = vset.pattern.permute.xlu0 0
        %246 = vperm.xlu0 %245, %v167
        %v247 = vpop.permute.xlu0 %246
        %248 = vset.pattern.permute.xlu0 0
        %249 = vperm.xlu0 %248, %v168
        %v250 = vpop.permute.xlu0 %249
        %251 = vset.pattern.permute.xlu0 0
        %252 = vperm.xlu0 %251, %v169
        %v253 = vpop.permute.xlu0 %252
        %254 = vset.pattern.permute.xlu0 0
        %255 = vperm.xlu0 %254, %v170
        %v256 = vpop.permute.xlu0 %255
        %257 = vset.pattern.permute.xlu0 0
        %258 = vperm.xlu0 %257, %v171
        %v259 = vpop.permute.xlu0 %258
        %260 = vset.pattern.permute.xlu0 0
        %261 = vperm.xlu0 %260, %v172
        %v262 = vpop.permute.xlu0 %261
        %263 = vset.pattern.permute.xlu0 0
        %264 = vperm.xlu0 %263, %v173
        %v265 = vpop.permute.xlu0 %264
        %266 = vset.pattern.permute.xlu0 0
        %267 = vperm.xlu0 %266, %v174
        %v268 = vpop.permute.xlu0 %267
        %269 = vset.pattern.permute.xlu0 0
        %270 = vperm.xlu0 %269, %v175
        %v271 = vpop.permute.xlu0 %270
        %272 = vset.pattern.permute.xlu0 0
        %273 = vperm.xlu0 %272, %v176
        %v274 = vpop.permute.xlu0 %273
        %vm275 = vcmp.eq.s32.totalorder %v178, %v181
        %vm276 = vcmp.eq.s32.totalorder %v178, %v184
        %vm277 = vcmp.eq.s32.totalorder %v178, %v187
        %vm278 = vcmp.eq.s32.totalorder %v178, %v190
        %vm279 = vcmp.eq.s32.totalorder %v178, %v193
        %vm280 = vcmp.eq.s32.totalorder %v178, %v196
        %vm281 = vcmp.eq.s32.totalorder %v178, %v199
        %vm282 = vcmp.eq.s32.totalorder %v178, %v202
        %vm283 = vcmp.eq.s32.totalorder %v178, %v205
        %vm284 = vcmp.eq.s32.totalorder %v178, %v208
        %vm285 = vcmp.eq.s32.totalorder %v178, %v211
        %vm286 = vcmp.eq.s32.totalorder %v178, %v214
        %vm287 = vcmp.eq.s32.totalorder %v178, %v217
        %vm288 = vcmp.eq.s32.totalorder %v178, %v220
        %vm289 = vcmp.eq.s32.totalorder %v178, %v223
        %vm290 = vcmp.eq.s32.totalorder %v178, %v226
        %vm291 = vcmp.eq.s32.totalorder %v178, %v229
        %vm292 = vcmp.eq.s32.totalorder %v178, %v232
        %vm293 = vcmp.eq.s32.totalorder %v178, %v235
        %vm294 = vcmp.eq.s32.totalorder %v178, %v238
        %vm295 = vcmp.eq.s32.totalorder %v178, %v241
        %vm296 = vcmp.eq.s32.totalorder %v178, %v244
        %vm297 = vcmp.eq.s32.totalorder %v178, %v247
        %vm298 = vcmp.eq.s32.totalorder %v178, %v250
        %vm299 = vcmp.eq.s32.totalorder %v178, %v253
        %vm300 = vcmp.eq.s32.totalorder %v178, %v256
        %vm301 = vcmp.eq.s32.totalorder %v178, %v259
        %vm302 = vcmp.eq.s32.totalorder %v178, %v262
        %vm303 = vcmp.eq.s32.totalorder %v178, %v265
        %vm304 = vcmp.eq.s32.totalorder %v178, %v268
        %vm305 = vcmp.eq.s32.totalorder %v178, %v271
        %vm306 = vcmp.eq.s32.totalorder %v178, %v274
        %v307 = vsel %vm275, 1, 0
        %v308 = vsel %vm276, 1, 0
        %v309 = vsel %vm277, 1, 0
        %v310 = vsel %vm278, 1, 0
        %v311 = vsel %vm279, 1, 0
        %v312 = vsel %vm280, 1, 0
        %v313 = vsel %vm281, 1, 0
        %v314 = vsel %vm282, 1, 0
        %v315 = vsel %vm283, 1, 0
        %v316 = vsel %vm284, 1, 0
        %v317 = vsel %vm285, 1, 0
        %v318 = vsel %vm286, 1, 0
        %v319 = vsel %vm287, 1, 0
        %v320 = vsel %vm288, 1, 0
        %v321 = vsel %vm289, 1, 0
        %v322 = vsel %vm290, 1, 0
        %v323 = vsel %vm291, 1, 0
        %v324 = vsel %vm292, 1, 0
        %v325 = vsel %vm293, 1, 0
        %v326 = vsel %vm294, 1, 0
        %v327 = vsel %vm295, 1, 0
        %v328 = vsel %vm296, 1, 0
        %v329 = vsel %vm297, 1, 0
        %v330 = vsel %vm298, 1, 0
        %v331 = vsel %vm299, 1, 0
        %v332 = vsel %vm300, 1, 0
        %v333 = vsel %vm301, 1, 0
        %v334 = vsel %vm302, 1, 0
        %v335 = vsel %vm303, 1, 0
        %v336 = vsel %vm304, 1, 0
        %v337 = vsel %vm305, 1, 0
        %v338 = vsel %vm306, 1, 0
        %v339 = vcvt.s32.f32 %v307
        %v340 = vcvt.s32.f32 %v308
        %v341 = vcvt.s32.f32 %v309
        %v342 = vcvt.s32.f32 %v310
        %v343 = vcvt.s32.f32 %v311
        %v344 = vcvt.s32.f32 %v312
        %v345 = vcvt.s32.f32 %v313
        %v346 = vcvt.s32.f32 %v314
        %v347 = vcvt.s32.f32 %v315
        %v348 = vcvt.s32.f32 %v316
        %v349 = vcvt.s32.f32 %v317
        %v350 = vcvt.s32.f32 %v318
        %v351 = vcvt.s32.f32 %v319
        %v352 = vcvt.s32.f32 %v320
        %v353 = vcvt.s32.f32 %v321
        %v354 = vcvt.s32.f32 %v322
        %v355 = vcvt.s32.f32 %v323
        %v356 = vcvt.s32.f32 %v324
        %v357 = vcvt.s32.f32 %v325
        %v358 = vcvt.s32.f32 %v326
        %v359 = vcvt.s32.f32 %v327
        %v360 = vcvt.s32.f32 %v328
        %v361 = vcvt.s32.f32 %v329
        %v362 = vcvt.s32.f32 %v330
        %v363 = vcvt.s32.f32 %v331
        %v364 = vcvt.s32.f32 %v332
        %v365 = vcvt.s32.f32 %v333
        %v366 = vcvt.s32.f32 %v334
        %v367 = vcvt.s32.f32 %v335
        %v368 = vcvt.s32.f32 %v336
        %v369 = vcvt.s32.f32 %v337
        %v370 = vcvt.s32.f32 %v338
        %v371 = vld [vmem:[%s1] sm:$0xff]
        %v372 = vld [vmem:[%s1 + $0x8] sm:$0xff]
        %v373 = vld [vmem:[%s1 + $0x10] sm:$0xff]
        %v374 = vld [vmem:[%s1 + $0x18] sm:$0xff]
        %vm375 = vcmask 261120
        %v377 = vsel %vm375, %v339, 0
        %v380 = vsel %vm375, %v340, 0
        %v383 = vsel %vm375, %v341, 0
        %v386 = vsel %vm375, %v342, 0
        %v389 = vsel %vm375, %v343, 0
        %v392 = vsel %vm375, %v344, 0
        %v395 = vsel %vm375, %v345, 0
        %v398 = vsel %vm375, %v346, 0
        %v401 = vsel %vm375, %v347, 0
        %v404 = vsel %vm375, %v348, 0
        %v407 = vsel %vm375, %v349, 0
        %v410 = vsel %vm375, %v350, 0
        %v413 = vsel %vm375, %v351, 0
        %v416 = vsel %vm375, %v352, 0
        %v419 = vsel %vm375, %v353, 0
        %v422 = vsel %vm375, %v354, 0
        %v425 = vsel %vm375, %v355, 0
        %v428 = vsel %vm375, %v356, 0
        %v431 = vsel %vm375, %v357, 0
        %v434 = vsel %vm375, %v358, 0
        %v437 = vsel %vm375, %v359, 0
        %v440 = vsel %vm375, %v360, 0
        %v443 = vsel %vm375, %v361, 0
        %v446 = vsel %vm375, %v362, 0
        %v449 = vsel %vm375, %v363, 0
        %v452 = vsel %vm375, %v364, 0
        %v455 = vsel %vm375, %v365, 0
        %v458 = vsel %vm375, %v366, 0
        %v461 = vsel %vm375, %v367, 0
        %v464 = vsel %vm375, %v368, 0
        %v467 = vsel %vm375, %v369, 0
        %v470 = vsel %vm375, %v370, 0
        %472 = vmatprep.subr.mxu0 0.0
        %473 = vmatpush1.msra.mxu0 %v371
        %474 = vmatprep.subr.mxu0 0.0
        %475 = vmatpush1.msra.mxu0 %v372
        %476 = vmatprep.subr.mxu0 0.0
        %477 = vmatpush1.msra.mxu0 %v373
        %478 = vmatprep.subr.mxu0 0.0
        %479 = vmatpush1.msra.mxu0 %v374
        %480 = vmatprep.subr.mxu0 0.0
        %481 = vmatpush1.msra.mxu0 0.0
        %482 = vmatprep.subr.mxu0 0.0
        %483 = vmatpush1.msra.mxu0 0.0
        %484 = vmatprep.subr.mxu0 0.0
        %485 = vmatpush1.msra.mxu0 0.0
        %486 = vmatprep.subr.mxu0 0.0
        %487 = vmatpush1.msra.mxu0 0.0
        %488 = vmatprep.subr.mxu0 0.0
        %489 = vmatpush1.msra.mxu0 0.0
        %490 = vmatprep.subr.mxu0 0.0
        %491 = vmatpush1.msra.mxu0 0.0
        %492 = vmatprep.subr.mxu0 0.0
        %493 = vmatpush1.msra.mxu0 0.0
        %494 = vmatprep.subr.mxu0 0.0
        %495 = vmatpush1.msra.mxu0 0.0
        %496 = vmatprep.subr.mxu0 0.0
        %497 = vmatpush1.msra.mxu0 0.0
        %498 = vmatprep.subr.mxu0 0.0
        %499 = vmatpush1.msra.mxu0 0.0
        %500 = vmatprep.subr.mxu0 0.0
        %501 = vmatpush1.msra.mxu0 0.0
        %502 = vmatprep.subr.mxu0 0.0
        %503 = vmatpush1.msra.mxu0 0.0
        %504 = vmatprep.subr.mxu0 0.0
        %505 = vmatpush1.msra.mxu0 0.0
        %506 = vmatprep.subr.mxu0 0.0
        %507 = vmatpush1.msra.mxu0 0.0
        %508 = vmatprep.subr.mxu0 0.0
        %509 = vmatpush1.msra.mxu0 0.0
        %510 = vmatprep.subr.mxu0 0.0
        %511 = vmatpush1.msra.mxu0 0.0
        %512 = vmatprep.subr.mxu0 0.0
        %513 = vmatpush1.msra.mxu0 0.0
        %514 = vmatprep.subr.mxu0 0.0
        %515 = vmatpush1.msra.mxu0 0.0
        %516 = vmatprep.subr.mxu0 0.0
        %517 = vmatpush1.msra.mxu0 0.0
        %518 = vmatprep.subr.mxu0 0.0
        %519 = vmatpush1.msra.mxu0 0.0
        %520 = vmatprep.subr.mxu0 0.0
        %521 = vmatpush1.msra.mxu0 0.0
        %522 = vmatprep.subr.mxu0 0.0
        %523 = vmatpush1.msra.mxu0 0.0
        %524 = vmatprep.subr.mxu0 0.0
        %525 = vmatpush1.msra.mxu0 0.0
        %526 = vmatprep.subr.mxu0 0.0
        %527 = vmatpush1.msra.mxu0 0.0
        %528 = vmatprep.subr.mxu0 0.0
        %529 = vmatpush1.msra.mxu0 0.0
        %530 = vmatprep.subr.mxu0 0.0
        %531 = vmatpush1.msra.mxu0 0.0
        %532 = vmatprep.subr.mxu0 0.0
        %533 = vmatpush1.msra.mxu0 0.0
        %534 = vmatprep.subr.mxu0 0.0
        %535 = vmatpush1.msra.mxu0 0.0
        %536 = vmatprep.mubr.f32.mxu0 0.0
        %537 = vmatmul.mubr.f32.gmra.mrb[0].mxu0 %v377
        %v538 = vpop.f32.mrb[0].mxu0
        %v539 = vadd.f32 0.0, %v538
        %v540 = vpop.f32.mrb[0].mxu0
        %541 = vmatprep.mubr.f32.mxu0 0.0
        %542 = vmatmul.mubr.f32.gmra.mrb[0].mxu0 %v380
        %v543 = vpop.f32.mrb[0].mxu0
        %v544 = vadd.f32 0.0, %v543
        %v545 = vpop.f32.mrb[0].mxu0
        %546 = vmatprep.mubr.f32.mxu0 0.0
        %547 = vmatmul.mubr.f32.gmra.mrb[0].mxu0 %v383
        %v548 = vpop.f32.mrb[0].mxu0
        %v549 = vadd.f32 0.0, %v548
        %v550 = vpop.f32.mrb[0].mxu0
        %551 = vmatprep.mubr.f32.mxu0 0.0
        %552 = vmatmul.mubr.f32.gmra.mrb[0].mxu0 %v386
        %v553 = vpop.f32.mrb[0].mxu0
        %v554 = vadd.f32 0.0, %v553
        %v555 = vpop.f32.mrb[0].mxu0
        %556 = vmatprep.mubr.f32.mxu0 0.0
        %557 = vmatmul.mubr.f32.gmra.mrb[0].mxu0 %v389
        %v558 = vpop.f32.mrb[0].mxu0
        %v559 = vadd.f32 0.0, %v558
        %v560 = vpop.f32.mrb[0].mxu0
        %561 = vmatprep.mubr.f32.mxu0 0.0
        %562 = vmatmul.mubr.f32.gmra.mrb[0].mxu0 %v392
        %v563 = vpop.f32.mrb[0].mxu0
        %v564 = vadd.f32 0.0, %v563
        %v565 = vpop.f32.mrb[0].mxu0
        %566 = vmatprep.mubr.f32.mxu0 0.0
        %567 = vmatmul.mubr.f32.gmra.mrb[0].mxu0 %v395
        %v568 = vpop.f32.mrb[0].mxu0
        %v569 = vadd.f32 0.0, %v568
        %v570 = vpop.f32.mrb[0].mxu0
        %571 = vmatprep.mubr.f32.mxu0 0.0
        %572 = vmatmul.mubr.f32.gmra.mrb[0].mxu0 %v398
        %v573 = vpop.f32.mrb[0].mxu0
        %v574 = vadd.f32 0.0, %v573
        %v575 = vpop.f32.mrb[0].mxu0
        %576 = vmatprep.mubr.f32.mxu0 0.0
        %577 = vmatmul.mubr.f32.gmra.mrb[0].mxu0 %v401
        %v578 = vpop.f32.mrb[0].mxu0
        %v579 = vadd.f32 0.0, %v578
        %v580 = vpop.f32.mrb[0].mxu0
        %581 = vmatprep.mubr.f32.mxu0 0.0
        %582 = vmatmul.mubr.f32.gmra.mrb[0].mxu0 %v404
        %v583 = vpop.f32.mrb[0].mxu0
        %v584 = vadd.f32 0.0, %v583
        %v585 = vpop.f32.mrb[0].mxu0
        %586 = vmatprep.mubr.f32.mxu0 0.0
        %587 = vmatmul.mubr.f32.gmra.mrb[0].mxu0 %v407
        %v588 = vpop.f32.mrb[0].mxu0
        %v589 = vadd.f32 0.0, %v588
        %v590 = vpop.f32.mrb[0].mxu0
        %591 = vmatprep.mubr.f32.mxu0 0.0
        %592 = vmatmul.mubr.f32.gmra.mrb[0].mxu0 %v410
        %v593 = vpop.f32.mrb[0].mxu0
        %v594 = vadd.f32 0.0, %v593
        %v595 = vpop.f32.mrb[0].mxu0
        %596 = vmatprep.mubr.f32.mxu0 0.0
        %597 = vmatmul.mubr.f32.gmra.mrb[0].mxu0 %v413
        %v598 = vpop.f32.mrb[0].mxu0
        %v599 = vadd.f32 0.0, %v598
        %v600 = vpop.f32.mrb[0].mxu0
        %601 = vmatprep.mubr.f32.mxu0 0.0
        %602 = vmatmul.mubr.f32.gmra.mrb[0].mxu0 %v416
        %v603 = vpop.f32.mrb[0].mxu0
        %v604 = vadd.f32 0.0, %v603
        %v605 = vpop.f32.mrb[0].mxu0
        %606 = vmatprep.mubr.f32.mxu0 0.0
        %607 = vmatmul.mubr.f32.gmra.mrb[0].mxu0 %v419
        %v608 = vpop.f32.mrb[0].mxu0
        %v609 = vadd.f32 0.0, %v608
        %v610 = vpop.f32.mrb[0].mxu0
        %611 = vmatprep.mubr.f32.mxu0 0.0
        %612 = vmatmul.mubr.f32.gmra.mrb[0].mxu0 %v422
        %v613 = vpop.f32.mrb[0].mxu0
        %v614 = vadd.f32 0.0, %v613
        %v615 = vpop.f32.mrb[0].mxu0
        %616 = vmatprep.mubr.f32.mxu0 0.0
        %617 = vmatmul.mubr.f32.gmra.mrb[0].mxu0 %v425
        %v618 = vpop.f32.mrb[0].mxu0
        %v619 = vadd.f32 0.0, %v618
        %v620 = vpop.f32.mrb[0].mxu0
        %621 = vmatprep.mubr.f32.mxu0 0.0
        %622 = vmatmul.mubr.f32.gmra.mrb[0].mxu0 %v428
        %v623 = vpop.f32.mrb[0].mxu0
        %v624 = vadd.f32 0.0, %v623
        %v625 = vpop.f32.mrb[0].mxu0
        %626 = vmatprep.mubr.f32.mxu0 0.0
        %627 = vmatmul.mubr.f32.gmra.mrb[0].mxu0 %v431
        %v628 = vpop.f32.mrb[0].mxu0
        %v629 = vadd.f32 0.0, %v628
        %v630 = vpop.f32.mrb[0].mxu0
        %631 = vmatprep.mubr.f32.mxu0 0.0
        %632 = vmatmul.mubr.f32.gmra.mrb[0].mxu0 %v434
        %v633 = vpop.f32.mrb[0].mxu0
        %v634 = vadd.f32 0.0, %v633
        %v635 = vpop.f32.mrb[0].mxu0
        %636 = vmatprep.mubr.f32.mxu0 0.0
        %637 = vmatmul.mubr.f32.gmra.mrb[0].mxu0 %v437
        %v638 = vpop.f32.mrb[0].mxu0
        %v639 = vadd.f32 0.0, %v638
        %v640 = vpop.f32.mrb[0].mxu0
        %641 = vmatprep.mubr.f32.mxu0 0.0
        %642 = vmatmul.mubr.f32.gmra.mrb[0].mxu0 %v440
        %v643 = vpop.f32.mrb[0].mxu0
        %v644 = vadd.f32 0.0, %v643
        %v645 = vpop.f32.mrb[0].mxu0
        %646 = vmatprep.mubr.f32.mxu0 0.0
        %647 = vmatmul.mubr.f32.gmra.mrb[0].mxu0 %v443
        %v648 = vpop.f32.mrb[0].mxu0
        %v649 = vadd.f32 0.0, %v648
        %v650 = vpop.f32.mrb[0].mxu0
        %651 = vmatprep.mubr.f32.mxu0 0.0
        %652 = vmatmul.mubr.f32.gmra.mrb[0].mxu0 %v446
        %v653 = vpop.f32.mrb[0].mxu0
        %v654 = vadd.f32 0.0, %v653
        %v655 = vpop.f32.mrb[0].mxu0
        %656 = vmatprep.mubr.f32.mxu0 0.0
        %657 = vmatmul.mubr.f32.gmra.mrb[0].mxu0 %v449
        %v658 = vpop.f32.mrb[0].mxu0
        %v659 = vadd.f32 0.0, %v658
        %v660 = vpop.f32.mrb[0].mxu0
        %661 = vmatprep.mubr.f32.mxu0 0.0
        %662 = vmatmul.mubr.f32.gmra.mrb[0].mxu0 %v452
        %v663 = vpop.f32.mrb[0].mxu0
        %v664 = vadd.f32 0.0, %v663
        %v665 = vpop.f32.mrb[0].mxu0
        %666 = vmatprep.mubr.f32.mxu0 0.0
        %667 = vmatmul.mubr.f32.gmra.mrb[0].mxu0 %v455
        %v668 = vpop.f32.mrb[0].mxu0
        %v669 = vadd.f32 0.0, %v668
        %v670 = vpop.f32.mrb[0].mxu0
        %671 = vmatprep.mubr.f32.mxu0 0.0
        %672 = vmatmul.mubr.f32.gmra.mrb[0].mxu0 %v458
        %v673 = vpop.f32.mrb[0].mxu0
        %v674 = vadd.f32 0.0, %v673
        %v675 = vpop.f32.mrb[0].mxu0
        %676 = vmatprep.mubr.f32.mxu0 0.0
        %677 = vmatmul.mubr.f32.gmra.mrb[0].mxu0 %v461
        %v678 = vpop.f32.mrb[0].mxu0
        %v679 = vadd.f32 0.0, %v678
        %v680 = vpop.f32.mrb[0].mxu0
        %681 = vmatprep.mubr.f32.mxu0 0.0
        %682 = vmatmul.mubr.f32.gmra.mrb[0].mxu0 %v464
        %v683 = vpop.f32.mrb[0].mxu0
        %v684 = vadd.f32 0.0, %v683
        %v685 = vpop.f32.mrb[0].mxu0
        %686 = vmatprep.mubr.f32.mxu0 0.0
        %687 = vmatmul.mubr.f32.gmra.mrb[0].mxu0 %v467
        %v688 = vpop.f32.mrb[0].mxu0
        %v689 = vadd.f32 0.0, %v688
        %v690 = vpop.f32.mrb[0].mxu0
        %691 = vmatprep.mubr.f32.mxu0 0.0
        %692 = vmatmul.mubr.f32.gmra.mrb[0].mxu0 %v470
        %v693 = vpop.f32.mrb[0].mxu0
        %v694 = vadd.f32 0.0, %v693
        %v695 = vpop.f32.mrb[0].mxu0
        %696 = vdwg.mxu0
        %697 = vst [vmem:[%s137] sm:$0xff] %v539
        %698 = vst [vmem:[%s137 + $0x8] sm:$0xff] %v544
        %699 = vst [vmem:[%s137 + $0x10] sm:$0xff] %v549
        %700 = vst [vmem:[%s137 + $0x18] sm:$0xff] %v554
        %701 = vst [vmem:[%s137 + $0x20] sm:$0xff] %v559
        %702 = vst [vmem:[%s137 + $0x28] sm:$0xff] %v564
        %703 = vst [vmem:[%s137 + $0x30] sm:$0xff] %v569
        %704 = vst [vmem:[%s137 + $0x38] sm:$0xff] %v574
        %705 = vst [vmem:[%s137 + $0x40] sm:$0xff] %v579
        %706 = vst [vmem:[%s137 + $0x48] sm:$0xff] %v584
        %707 = vst [vmem:[%s137 + $0x50] sm:$0xff] %v589
        %708 = vst [vmem:[%s137 + $0x58] sm:$0xff] %v594
        %709 = vst [vmem:[%s137 + $0x60] sm:$0xff] %v599
        %710 = vst [vmem:[%s137 + $0x68] sm:$0xff] %v604
        %711 = vst [vmem:[%s137 + $0x70] sm:$0xff] %v609
        %712 = vst [vmem:[%s137 + $0x78] sm:$0xff] %v614
        %713 = vst [vmem:[%s137 + $0x80] sm:$0xff] %v619
        %714 = vst [vmem:[%s137 + $0x88] sm:$0xff] %v624
        %715 = vst [vmem:[%s137 + $0x90] sm:$0xff] %v629
        %716 = vst [vmem:[%s137 + $0x98] sm:$0xff] %v634
        %717 = vst [vmem:[%s137 + $0xa0] sm:$0xff] %v639
        %718 = vst [vmem:[%s137 + $0xa8] sm:$0xff] %v644
        %719 = vst [vmem:[%s137 + $0xb0] sm:$0xff] %v649
        %720 = vst [vmem:[%s137 + $0xb8] sm:$0xff] %v654
        %721 = vst [vmem:[%s137 + $0xc0] sm:$0xff] %v659
        %722 = vst [vmem:[%s137 + $0xc8] sm:$0xff] %v664
        %723 = vst [vmem:[%s137 + $0xd0] sm:$0xff] %v669
        %724 = vst [vmem:[%s137 + $0xd8] sm:$0xff] %v674
        %725 = vst [vmem:[%s137 + $0xe0] sm:$0xff] %v679
        %726 = vst [vmem:[%s137 + $0xe8] sm:$0xff] %v684
        %727 = vst [vmem:[%s137 + $0xf0] sm:$0xff] %v689
        %728 = vst [vmem:[%s137 + $0xf8] sm:$0xff] %v694
        %s729 = sand.u32 %s71, 1
        %s730 = scalar_lea.sflag [#allocation3], %s729
        %s731 = sand.u32 %s71, 1
        %s732 = smul.addr %s731, 256
        %s733 = scalar_lea.vmem [#allocation2], %s732
        // Predicated region
        $region29: #{tpu_custom_call.1} parent=27 // pred_check
          %p734 = pneg %p81
        $region30: #{tpu_custom_call.1} parent=27 // pred_check_branch
          %736 = sbr.rel (%p734) target = $region32
        $region31: #{tpu_custom_call.1} parent=27 // pred_region
          %s737 = smul.u32 32, %s16
          %s739 = ssub.s32 4096, 4096
          %740 = vsyncadd %s730, %s739
          %s741 = smul.addr %s737, 128
          %s742 = scalar_lea.hbm %s2, %s741
          %s743 = sshll.u32 %s733, 4
          %s744 = int_to_ptr.vmem [resolvable:$true] %s743
          %749 = dma.vmem_to_hbm [thread:$0]  %s744, 4096, %s742, %s730, 128, 128, 8
        $region32: #{tpu_custom_call.1} parent=27 // pred_fallthru
          _
      $region28: #{tpu_custom_call.1} parent=5 // pred_fallthru
        _
      %p750 = scmp.le.s32.totalorder 2, %s11
      // Predicated region
      $region33: #{tpu_custom_call.1} parent=5 // pred_check
        %p751 = pneg %p750
      $region34: #{tpu_custom_call.1} parent=5 // pred_check_branch
        %753 = sbr.rel (%p751) target = $region36
      $region35: #{tpu_custom_call.1} parent=5 // pred_region
        %s754 = ssub.s32 %s11, 2
        // Predicated region
        $region37: #{tpu_custom_call.1} parent=35 // pred_check
          %p755 = pneg %p87
        $region38: #{tpu_custom_call.1} parent=35 // pred_check_branch
          %757 = sbr.rel (%p755) target = $region40
        $region39: #{tpu_custom_call.1} parent=35 // pred_region
          %s758 = sand.u32 %s72, 1
          %s759 = scalar_lea.sflag [#allocation3], %s758
          %s760 = sand.u32 %s72, 1
          %s761 = smul.addr %s760, 256
          %s762 = scalar_lea.vmem [#allocation2], %s761
          %763 = dma.done %s759, 4096
        $region40: #{tpu_custom_call.1} parent=35 // pred_fallthru
          _
      $region36: #{tpu_custom_call.1} parent=5 // pred_fallthru
        _
    $region6: #{tpu_custom_call.1} parent=1 // loop_footer
      %s15 = sadd.s32 1, %s11
    $region7: #{tpu_custom_call.1} parent=1 // loop_footer_branch
      %10 = sbr.rel target = $region3
    $region8: #{tpu_custom_call.1} parent=1 // loop_exit
      _
    %764 = vsyncpa [#allocation3], 1
    %s765 = scalar_lea.sflag [#allocation3], 1
    %766 = vsyncpa %s765, 1

</llo_original>
